<compile_context>
chip_gen: v7x
topology: tpu7x:2x2x1
jax: 0.10.0
libtpu: 0.0.40
codegen_flags: <defaults>
</compile_context>

<pallas_src>
import jax
import jax.numpy as jnp
from jax.experimental import pallas as pl
from jax.experimental.pallas import tpu as pltpu


def mlp_kernel(x_ref, w1_ref, b1_ref, w2_ref, b2_ref, w3_ref, b3_ref, o_ref):
    # x_ref: (15, TB) bf16 ; weights (out, in) bf16 ; biases (out, 1) f32 ; o_ref (15, TB) f32
    xt = x_ref[...]
    # Layer 1: (64,15) @ (15,TB) -> (64,TB), f32 acc, bias + ReLU in f32
    h1 = jnp.dot(w1_ref[...], xt, preferred_element_type=jnp.float32) + b1_ref[...]
    h1 = jnp.maximum(h1, 0.0).astype(jnp.bfloat16)
    # Layer 2: (128,64) @ (64,TB) -> (128,TB)
    h2 = jnp.dot(w2_ref[...], h1, preferred_element_type=jnp.float32) + b2_ref[...]
    h2 = jnp.maximum(h2, 0.0).astype(jnp.bfloat16)
    # Layer 3: (15,128) @ (128,TB) -> (15,TB), no activation
    out = jnp.dot(w3_ref[...], h2, preferred_element_type=jnp.float32) + b3_ref[...]
    o_ref[...] = out.astype(o_ref.dtype)


def mynet_forward(x, params):
    """x: (B, 15) float32. params: transposed weights (out,in) f32 + biases (out,1) f32."""
    w1, b1, w2, b2, w3, b3 = params
    B, in_dim = x.shape
    out_dim = w3.shape[0]

    # Batch tile: lane-dense multiple of 128 when the batch is big enough (cap at 512 to
    # keep the (128, TB) f32 intermediate near vreg capacity); otherwise one full block.
    if B >= 128:
        tb = min(512, (B // 128) * 128)
    else:
        tb = B
    n_tiles = pl.cdiv(B, tb)
    b_pad = n_tiles * tb

    # Batch-on-lanes + bf16 MXU inputs.
    xt = x.T.astype(jnp.bfloat16)                      # (15, B)
    if b_pad != B:
        xt = jnp.pad(xt, ((0, 0), (0, b_pad - B)))     # (15, B_pad)
    w1b = w1.astype(jnp.bfloat16)
    w2b = w2.astype(jnp.bfloat16)
    w3b = w3.astype(jnp.bfloat16)

    resident = lambda a: pl.BlockSpec(a.shape, lambda i: (0, 0))  # DMA once, stay in VMEM

    out_t = pl.pallas_call(
        mlp_kernel,
        out_shape=jax.ShapeDtypeStruct((out_dim, b_pad), jnp.float32),
        grid_spec=pl.GridSpec(
            grid=(n_tiles,),
            in_specs=[
                pl.BlockSpec((in_dim, tb), lambda i: (0, i)),   # x tile (15, TB)
                resident(w1b), resident(b1),
                resident(w2b), resident(b2),
                resident(w3b), resident(b3),
            ],
            out_specs=pl.BlockSpec((out_dim, tb), lambda i: (0, i)),  # lane-dense (15, TB)
        ),
        compiler_params=pltpu.CompilerParams(
            dimension_semantics=("parallel",),
        ),
    )(xt, w1b, b1, w2b, b2, w3b, b3)

    return out_t[:, :B].T  # back to (B, 15) row-major


def init_params(key):
    # Deterministic init mimicking nn.Linear default (uniform(-1/sqrt(fan_in), +1/sqrt(fan_in))).
    # Weights stored transposed as (out, in); biases as (out, 1) — batch-on-lanes layout.
    dims = [(15, 64), (64, 128), (128, 15)]
    params = []
    for fan_in, fan_out in dims:
        k_w, k_b, key = jax.random.split(key, 3)
        bound = 1.0 / jnp.sqrt(fan_in)
        w = jax.random.uniform(k_w, (fan_out, fan_in), jnp.float32, -bound, bound)
        b = jax.random.uniform(k_b, (fan_out, 1), jnp.float32, -bound, bound)
        params.extend([w, b])
    return tuple(params)


def reference_forward(x, params):
    # Pure-JAX reference on the same bf16-input / f32-accumulate path as the kernel.
    w1, b1, w2, b2, w3, b3 = params
    xb = x.astype(jnp.bfloat16)
    h1 = jnp.dot(xb, w1.T.astype(jnp.bfloat16), preferred_element_type=jnp.float32) + b1.T
    h1 = jnp.maximum(h1, 0.0).astype(jnp.bfloat16)
    h2 = jnp.dot(h1, w2.T.astype(jnp.bfloat16), preferred_element_type=jnp.float32) + b2.T
    h2 = jnp.maximum(h2, 0.0).astype(jnp.bfloat16)
    return jnp.dot(h2, w3.T.astype(jnp.bfloat16), preferred_element_type=jnp.float32) + b3.T


if __name__ == "__main__":
    key = jax.random.PRNGKey(0)
    k_x, k_p = jax.random.split(key)
    batch = 8
    x = jax.random.normal(k_x, (batch, 15), jnp.float32)
    params = init_params(k_p)

    out = mynet_forward(x, params)
    out = jax.block_until_ready(out)

    ref = reference_forward(x, params)
    assert out.shape == (batch, 15)
    # bf16 MXU inputs -> relaxed tolerance vs the matching-path reference.
    assert jnp.allclose(out, ref, atol=2e-2, rtol=2e-2), "mismatch vs pure-JAX reference"
    print("KERNEL_OK")
</pallas_src>

<mosaic_0001>
module attributes {stable_mosaic.version = 11 : i64} {
  func.func @mlp_kernel(%arg0: i32, %arg1: memref<15x8xbf16, #tpu.memory_space<vmem>>, %arg2: memref<64x15xbf16, #tpu.memory_space<vmem>>, %arg3: memref<64x1xf32, #tpu.memory_space<vmem>>, %arg4: memref<128x64xbf16, #tpu.memory_space<vmem>>, %arg5: memref<128x1xf32, #tpu.memory_space<vmem>>, %arg6: memref<15x128xbf16, #tpu.memory_space<vmem>>, %arg7: memref<15x1xf32, #tpu.memory_space<vmem>>, %arg8: memref<15x8xf32, #tpu.memory_space<vmem>>) attributes {dimension_semantics = [#tpu.dimension_semantics<parallel>], iteration_bounds = array<i64: 1>, scalar_prefetch = 0 : i64, scratch_operands = 0 : i64, tpu.core_type = #tpu.core_type<tc>, window_params = [{transform_indices = @transform_0, window_bounds = array<i64: 15, 8>}, {pipeline_mode = #tpu.pipeline_mode<synchronous>, transform_indices = @transform_1, window_bounds = array<i64: 64, 15>}, {pipeline_mode = #tpu.pipeline_mode<synchronous>, transform_indices = @transform_2, window_bounds = array<i64: 64, 1>}, {pipeline_mode = #tpu.pipeline_mode<synchronous>, transform_indices = @transform_3, window_bounds = array<i64: 128, 64>}, {pipeline_mode = #tpu.pipeline_mode<synchronous>, transform_indices = @transform_4, window_bounds = array<i64: 128, 1>}, {pipeline_mode = #tpu.pipeline_mode<synchronous>, transform_indices = @transform_5, window_bounds = array<i64: 15, 128>}, {pipeline_mode = #tpu.pipeline_mode<synchronous>, transform_indices = @transform_6, window_bounds = array<i64: 15, 1>}, {transform_indices = @transform_7, window_bounds = array<i64: 15, 8>}]} {
    %c0 = arith.constant 0 : index
    %c0_0 = arith.constant 0 : index
    %0 = vector.load %arg1[%c0, %c0_0] : memref<15x8xbf16, #tpu.memory_space<vmem>>, vector<15x8xbf16>
    %c0_1 = arith.constant 0 : index
    %c0_2 = arith.constant 0 : index
    %1 = vector.load %arg2[%c0_1, %c0_2] : memref<64x15xbf16, #tpu.memory_space<vmem>>, vector<64x15xbf16>
    %cst = arith.constant dense<0.000000e+00> : vector<64x8xf32>
    %2 = tpu.matmul %1, %0, %cst {dimension_numbers = #tpu.dot_dimension_numbers<[1], [0], [0], [1], [0, 0, 1, 1], [], []>} : vector<64x15xbf16>, vector<15x8xbf16>, vector<64x8xf32> -> vector<64x8xf32>
    %c0_3 = arith.constant 0 : index
    %c0_4 = arith.constant 0 : index
    %3 = vector.load %arg3[%c0_3, %c0_4] : memref<64x1xf32, #tpu.memory_space<vmem>>, vector<64x1xf32>
    %4 = vector.broadcast %3 : vector<64x1xf32> to vector<64x8xf32>
    %5 = arith.addf %2, %4 : vector<64x8xf32>
    %cst_5 = arith.constant 0.000000e+00 : f32
    %6 = vector.broadcast %cst_5 : f32 to vector<64x8xf32>
    %7 = arith.maximumf %5, %6 : vector<64x8xf32>
    %8 = arith.truncf %7 : vector<64x8xf32> to vector<64x8xbf16>
    %c0_6 = arith.constant 0 : index
    %c0_7 = arith.constant 0 : index
    %9 = vector.load %arg4[%c0_6, %c0_7] : memref<128x64xbf16, #tpu.memory_space<vmem>>, vector<128x64xbf16>
    %cst_8 = arith.constant dense<0.000000e+00> : vector<128x8xf32>
    %10 = tpu.matmul %9, %8, %cst_8 {dimension_numbers = #tpu.dot_dimension_numbers<[1], [0], [0], [1], [0, 0, 1, 1], [], []>} : vector<128x64xbf16>, vector<64x8xbf16>, vector<128x8xf32> -> vector<128x8xf32>
    %c0_9 = arith.constant 0 : index
    %c0_10 = arith.constant 0 : index
    %11 = vector.load %arg5[%c0_9, %c0_10] : memref<128x1xf32, #tpu.memory_space<vmem>>, vector<128x1xf32>
    %12 = vector.broadcast %11 : vector<128x1xf32> to vector<128x8xf32>
    %13 = arith.addf %10, %12 : vector<128x8xf32>
    %cst_11 = arith.constant 0.000000e+00 : f32
    %14 = vector.broadcast %cst_11 : f32 to vector<128x8xf32>
    %15 = arith.maximumf %13, %14 : vector<128x8xf32>
    %16 = arith.truncf %15 : vector<128x8xf32> to vector<128x8xbf16>
    %c0_12 = arith.constant 0 : index
    %c0_13 = arith.constant 0 : index
    %17 = vector.load %arg6[%c0_12, %c0_13] : memref<15x128xbf16, #tpu.memory_space<vmem>>, vector<15x128xbf16>
    %cst_14 = arith.constant dense<0.000000e+00> : vector<15x8xf32>
    %18 = tpu.matmul %17, %16, %cst_14 {dimension_numbers = #tpu.dot_dimension_numbers<[1], [0], [0], [1], [0, 0, 1, 1], [], []>} : vector<15x128xbf16>, vector<128x8xbf16>, vector<15x8xf32> -> vector<15x8xf32>
    %c0_15 = arith.constant 0 : index
    %c0_16 = arith.constant 0 : index
    %19 = vector.load %arg7[%c0_15, %c0_16] : memref<15x1xf32, #tpu.memory_space<vmem>>, vector<15x1xf32>
    %20 = vector.broadcast %19 : vector<15x1xf32> to vector<15x8xf32>
    %21 = arith.addf %18, %20 : vector<15x8xf32>
    %c0_17 = arith.constant 0 : index
    %c0_18 = arith.constant 0 : index
    %22 = vector.load %arg8[%c0_17, %c0_18] : memref<15x8xf32, #tpu.memory_space<vmem>>, vector<15x8xf32>
    tpu.vector_store %arg8[%c0_17, %c0_18], %21 {strides = array<i32>} : memref<15x8xf32, #tpu.memory_space<vmem>>, vector<15x8xf32>,
    return
  }
  func.func @transform_0(%arg0: i32) -> (i32, i32) {
    %c0_i32 = arith.constant 0 : i32
    %c0_i32_0 = arith.constant 0 : i32
    return %c0_i32, %arg0 : i32, i32
  }
  func.func @transform_1(%arg0: i32) -> (i32, i32) {
    %c0_i32 = arith.constant 0 : i32
    %c0_i32_0 = arith.constant 0 : i32
    %c0_i32_1 = arith.constant 0 : i32
    return %c0_i32, %c0_i32_0 : i32, i32
  }
  func.func @transform_2(%arg0: i32) -> (i32, i32) {
    %c0_i32 = arith.constant 0 : i32
    %c0_i32_0 = arith.constant 0 : i32
    %c0_i32_1 = arith.constant 0 : i32
    return %c0_i32, %c0_i32_0 : i32, i32
  }
  func.func @transform_3(%arg0: i32) -> (i32, i32) {
    %c0_i32 = arith.constant 0 : i32
    %c0_i32_0 = arith.constant 0 : i32
    %c0_i32_1 = arith.constant 0 : i32
    return %c0_i32, %c0_i32_0 : i32, i32
  }
  func.func @transform_4(%arg0: i32) -> (i32, i32) {
    %c0_i32 = arith.constant 0 : i32
    %c0_i32_0 = arith.constant 0 : i32
    %c0_i32_1 = arith.constant 0 : i32
    return %c0_i32, %c0_i32_0 : i32, i32
  }
  func.func @transform_5(%arg0: i32) -> (i32, i32) {
    %c0_i32 = arith.constant 0 : i32
    %c0_i32_0 = arith.constant 0 : i32
    %c0_i32_1 = arith.constant 0 : i32
    return %c0_i32, %c0_i32_0 : i32, i32
  }
  func.func @transform_6(%arg0: i32) -> (i32, i32) {
    %c0_i32 = arith.constant 0 : i32
    %c0_i32_0 = arith.constant 0 : i32
    %c0_i32_1 = arith.constant 0 : i32
    return %c0_i32, %c0_i32_0 : i32, i32
  }
  func.func @transform_7(%arg0: i32) -> (i32, i32) {
    %c0_i32 = arith.constant 0 : i32
    %c0_i32_0 = arith.constant 0 : i32
    return %c0_i32, %arg0 : i32, i32
  }
}

</mosaic_0001>

<llo_original>
// kernel: tpu_custom_call.1
$region0: #{tpu_custom_call.1}
  #allocation0 [shape = 'u32[]', space=smem, size = 0x4, offset = 0x4, fixed_abs, tag = 'smem constant byte address 0x4 - core index']
  #allocation1 [shape = 'u32[144,128]{1,0:T(1,128)}', space=vmem, size = 0x12000, scoped, tag = 'internal scratch']
  %s0 = inlined_call_operand.vmem [shape: bf16[15,8], index: 0, kind: input, shape index: {}]
  %s1 = inlined_call_operand.vmem [shape: bf16[64,15], index: 1, kind: input, shape index: {}]
  %s2 = inlined_call_operand.vmem [shape: f32[64,1], index: 2, kind: input, shape index: {}]
  %s3 = inlined_call_operand.vmem [shape: bf16[128,64], index: 3, kind: input, shape index: {}]
  %s4 = inlined_call_operand.vmem [shape: f32[128,1], index: 4, kind: input, shape index: {}]
  %s5 = inlined_call_operand.vmem [shape: bf16[15,128], index: 5, kind: input, shape index: {}]
  %s6 = inlined_call_operand.vmem [shape: f32[15,1], index: 6, kind: input, shape index: {}]
  %s7 = inlined_call_operand.vmem [shape: f32[15,8], index: 7, kind: output, shape index: {}]
  %s8 = sld [smem:[#allocation0]]
  $region38: #{tpu_custom_call.1} parent=0
    _
  %s10 = ssub.s32 1, %s8
  %s11 = scalar_select 0, %s10, %s8
  // Predicated region
  $region2: #{tpu_custom_call.1} parent=0 // pred_check
    _
  $region3: #{tpu_custom_call.1} parent=0 // pred_check_branch
    %13 = sbr.rel (0) target = $region5
  $region4: #{tpu_custom_call.1} parent=0 // pred_region
    _
  $region5: #{tpu_custom_call.1} parent=0 // pred_fallthru
    _
  // Predicated region
  $region6: #{tpu_custom_call.1} parent=0 // pred_check
    _
  $region7: #{tpu_custom_call.1} parent=0 // pred_check_branch
    %15 = sbr.rel (0) target = $region9
  $region8: #{tpu_custom_call.1} parent=0 // pred_region
    _
  $region9: #{tpu_custom_call.1} parent=0 // pred_fallthru
    _
  // Predicated region
  $region10: #{tpu_custom_call.1} parent=0 // pred_check
    _
  $region11: #{tpu_custom_call.1} parent=0 // pred_check_branch
    %17 = sbr.rel (0) target = $region13
  $region12: #{tpu_custom_call.1} parent=0 // pred_region
    _
  $region13: #{tpu_custom_call.1} parent=0 // pred_fallthru
    _
  // Predicated region
  $region14: #{tpu_custom_call.1} parent=0 // pred_check
    _
  $region15: #{tpu_custom_call.1} parent=0 // pred_check_branch
    %19 = sbr.rel (0) target = $region17
  $region16: #{tpu_custom_call.1} parent=0 // pred_region
    _
  $region17: #{tpu_custom_call.1} parent=0 // pred_fallthru
    _
  // Predicated region
  $region18: #{tpu_custom_call.1} parent=0 // pred_check
    _
  $region19: #{tpu_custom_call.1} parent=0 // pred_check_branch
    %21 = sbr.rel (0) target = $region21
  $region20: #{tpu_custom_call.1} parent=0 // pred_region
    _
  $region21: #{tpu_custom_call.1} parent=0 // pred_fallthru
    _
  // Predicated region
  $region22: #{tpu_custom_call.1} parent=0 // pred_check
    _
  $region23: #{tpu_custom_call.1} parent=0 // pred_check_branch
    %23 = sbr.rel (0) target = $region25
  $region24: #{tpu_custom_call.1} parent=0 // pred_region
    _
  $region25: #{tpu_custom_call.1} parent=0 // pred_fallthru
    _
  // Predicated region
  $region26: #{tpu_custom_call.1} parent=0 // pred_check
    _
  $region27: #{tpu_custom_call.1} parent=0 // pred_check_branch
    %25 = sbr.rel (0) target = $region29
  $region28: #{tpu_custom_call.1} parent=0 // pred_region
    _
  $region29: #{tpu_custom_call.1} parent=0 // pred_fallthru
    _
  %v27 = vld [vmem:[%s0] sm:$0xf]
  %v28 = vld [vmem:[%s0 + $0x4] sm:$0xf]
  %v29 = vld [vmem:[%s1] sm:$0xf]
  %v30 = vld [vmem:[%s1 + $0x4] sm:$0xf]
  %v31 = vld [vmem:[%s1 + $0x8] sm:$0xf]
  %v32 = vld [vmem:[%s1 + $0xc] sm:$0xf]
  %v33 = vld [vmem:[%s1 + $0x10] sm:$0xf]
  %v34 = vld [vmem:[%s1 + $0x14] sm:$0xf]
  %v35 = vld [vmem:[%s1 + $0x18] sm:$0xf]
  %v36 = vld [vmem:[%s1 + $0x1c] sm:$0xf]
  %v37 = vld [vmem:[%s2] sm:$0xff]
  %v38 = vld [vmem:[%s2 + $0x8] sm:$0xff]
  %v39 = vld [vmem:[%s2 + $0x10] sm:$0xff]
  %v40 = vld [vmem:[%s2 + $0x18] sm:$0xff]
  %v41 = vld [vmem:[%s2 + $0x20] sm:$0xff]
  %v42 = vld [vmem:[%s2 + $0x28] sm:$0xff]
  %v43 = vld [vmem:[%s2 + $0x30] sm:$0xff]
  %v44 = vld [vmem:[%s2 + $0x38] sm:$0xff]
  %46 = vset.pattern.permute.xlu0 0
  %47 = vperm.xlu0 %46, %v37
  %v48 = vpop.permute.xlu0 %47
  %51 = vset.pattern.permute.xlu0 0
  %52 = vperm.xlu0 %51, %v38
  %v53 = vpop.permute.xlu0 %52
  %56 = vset.pattern.permute.xlu0 0
  %57 = vperm.xlu0 %56, %v39
  %v58 = vpop.permute.xlu0 %57
  %61 = vset.pattern.permute.xlu0 0
  %62 = vperm.xlu0 %61, %v40
  %v63 = vpop.permute.xlu0 %62
  %66 = vset.pattern.permute.xlu0 0
  %67 = vperm.xlu0 %66, %v41
  %v68 = vpop.permute.xlu0 %67
  %71 = vset.pattern.permute.xlu0 0
  %72 = vperm.xlu0 %71, %v42
  %v73 = vpop.permute.xlu0 %72
  %76 = vset.pattern.permute.xlu0 0
  %77 = vperm.xlu0 %76, %v43
  %v78 = vpop.permute.xlu0 %77
  %81 = vset.pattern.permute.xlu0 0
  %82 = vperm.xlu0 %81, %v44
  %v83 = vpop.permute.xlu0 %82
  %v93 = vunpack.c.l.b16 %v29
  %v94 = vunpack.c.l.b16 %v30
  %v95 = vunpack.c.l.b16 %v31
  %v96 = vunpack.c.l.b16 %v32
  %v97 = vunpack.c.l.b16 %v33
  %v98 = vunpack.c.l.b16 %v34
  %v99 = vunpack.c.l.b16 %v35
  %v100 = vunpack.c.l.b16 %v36
  %v101 = vpack.c.b16 %v94, %v93
  %v102 = vpack.c.b16 %v96, %v95
  %v103 = vpack.c.b16 %v98, %v97
  %v104 = vpack.c.b16 %v100, %v99
  %v107 = vunpack.c.l.b16 %v27
  %v108 = vunpack.c.l.b16 %v28
  %v109 = vpack.c.b16 %v108, %v107
  %vm110 = vcmask 121856
  %v112 = vsel %vm110, %v101, 0
  %v115 = vsel %vm110, %v102, 0
  %v118 = vsel %vm110, %v103, 0
  %v121 = vsel %vm110, %v104, 0
  %vm123 = vcmask 1046528
  %vm124 = vcmask 1047552
  %v125 = vsel %vm123, 4294967295, 65535
  %v126 = vsel %vm124, %v125, 0
  %v128 = vand.u32 %v109, %v126
  %130 = vmatprep.subr.bf16.mxu0 0
  %131 = vmatpush1.bf16.msra.mxu0 %v128
  %132 = vmatprep.subr.bf16.mxu0 0
  %133 = vmatpush1.bf16.msra.mxu0 0
  %134 = vmatprep.subr.bf16.mxu0 0
  %135 = vmatpush1.bf16.msra.mxu0 0
  %136 = vmatprep.subr.bf16.mxu0 0
  %137 = vmatpush1.bf16.msra.mxu0 0
  %138 = vmatprep.subr.bf16.mxu0 0
  %139 = vmatpush1.bf16.msra.mxu0 0
  %140 = vmatprep.subr.bf16.mxu0 0
  %141 = vmatpush1.bf16.msra.mxu0 0
  %142 = vmatprep.subr.bf16.mxu0 0
  %143 = vmatpush1.bf16.msra.mxu0 0
  %144 = vmatprep.subr.bf16.mxu0 0
  %145 = vmatpush1.bf16.msra.mxu0 0
  %146 = vmatprep.subr.bf16.mxu0 0
  %147 = vmatpush1.bf16.msra.mxu0 0
  %148 = vmatprep.subr.bf16.mxu0 0
  %149 = vmatpush1.bf16.msra.mxu0 0
  %150 = vmatprep.subr.bf16.mxu0 0
  %151 = vmatpush1.bf16.msra.mxu0 0
  %152 = vmatprep.subr.bf16.mxu0 0
  %153 = vmatpush1.bf16.msra.mxu0 0
  %154 = vmatprep.subr.bf16.mxu0 0
  %155 = vmatpush1.bf16.msra.mxu0 0
  %156 = vmatprep.subr.bf16.mxu0 0
  %157 = vmatpush1.bf16.msra.mxu0 0
  %158 = vmatprep.subr.bf16.mxu0 0
  %159 = vmatpush1.bf16.msra.mxu0 0
  %160 = vmatprep.subr.bf16.mxu0 0
  %161 = vmatpush1.bf16.msra.mxu0 0
  %162 = vmatprep.mubr.bf16.mxu0 0
  %163 = vmatmul.mubr.bf16.gmra.mrb[0].mxu0 %v112
  %v164 = vpop.f32.mrb[0].mxu0
  %v165 = vadd.f32 %v48, %v164
  %v166 = vpop.f32.mrb[0].mxu0
  %v167 = vpop.f32.mrb[0].mxu0
  %v168 = vadd.f32 %v53, %v167
  %v169 = vpop.f32.mrb[0].mxu0
  %170 = vmatprep.mubr.bf16.mxu0 0
  %171 = vmatmul.mubr.bf16.gmra.mrb[0].mxu0 %v115
  %v172 = vpop.f32.mrb[0].mxu0
  %v173 = vadd.f32 %v58, %v172
  %v174 = vpop.f32.mrb[0].mxu0
  %v175 = vpop.f32.mrb[0].mxu0
  %v176 = vadd.f32 %v63, %v175
  %v177 = vpop.f32.mrb[0].mxu0
  %178 = vmatprep.mubr.bf16.mxu0 0
  %179 = vmatmul.mubr.bf16.gmra.mrb[0].mxu0 %v118
  %v180 = vpop.f32.mrb[0].mxu0
  %v181 = vadd.f32 %v68, %v180
  %v182 = vpop.f32.mrb[0].mxu0
  %v183 = vpop.f32.mrb[0].mxu0
  %v184 = vadd.f32 %v73, %v183
  %v185 = vpop.f32.mrb[0].mxu0
  %186 = vmatprep.mubr.bf16.mxu0 0
  %187 = vmatmul.mubr.bf16.gmra.mrb[0].mxu0 %v121
  %v188 = vpop.f32.mrb[0].mxu0
  %v189 = vadd.f32 %v78, %v188
  %v190 = vpop.f32.mrb[0].mxu0
  %v191 = vpop.f32.mrb[0].mxu0
  %v192 = vadd.f32 %v83, %v191
  %v193 = vpop.f32.mrb[0].mxu0
  %194 = vdwg.mxu0
  %v195 = vmax.f32 %v165, 0.0
  %v196 = vmax.f32 %v168, 0.0
  %v197 = vmax.f32 %v173, 0.0
  %v198 = vmax.f32 %v176, 0.0
  %v199 = vmax.f32 %v181, 0.0
  %v200 = vmax.f32 %v184, 0.0
  %v201 = vmax.f32 %v189, 0.0
  %v202 = vmax.f32 %v192, 0.0
  %v203 = vpack.c.bf16 %v196, %v195
  %v204 = vpack.c.bf16 %v198, %v197
  %v205 = vpack.c.bf16 %v200, %v199
  %v206 = vpack.c.bf16 %v202, %v201
  %v207 = vld [vmem:[%s3] sm:$0xf]
  %v208 = vld [vmem:[%s3 + $0x4] sm:$0xf]
  %v209 = vld [vmem:[%s3 + $0x8] sm:$0xf]
  %v210 = vld [vmem:[%s3 + $0xc] sm:$0xf]
  %v211 = vld [vmem:[%s3 + $0x10] sm:$0xf]
  %v212 = vld [vmem:[%s3 + $0x14] sm:$0xf]
  %v213 = vld [vmem:[%s3 + $0x18] sm:$0xf]
  %v214 = vld [vmem:[%s3 + $0x1c] sm:$0xf]
  %v215 = vld [vmem:[%s3 + $0x20] sm:$0xf]
  %v216 = vld [vmem:[%s3 + $0x24] sm:$0xf]
  %v217 = vld [vmem:[%s3 + $0x28] sm:$0xf]
  %v218 = vld [vmem:[%s3 + $0x2c] sm:$0xf]
  %v219 = vld [vmem:[%s3 + $0x30] sm:$0xf]
  %v220 = vld [vmem:[%s3 + $0x34] sm:$0xf]
  %v221 = vld [vmem:[%s3 + $0x38] sm:$0xf]
  %v222 = vld [vmem:[%s3 + $0x3c] sm:$0xf]
  %v223 = vld [vmem:[%s4] sm:$0xff]
  %v224 = vld [vmem:[%s4 + $0x8] sm:$0xff]
  %v225 = vld [vmem:[%s4 + $0x10] sm:$0xff]
  %v226 = vld [vmem:[%s4 + $0x18] sm:$0xff]
  %v227 = vld [vmem:[%s4 + $0x20] sm:$0xff]
  %v228 = vld [vmem:[%s4 + $0x28] sm:$0xff]
  %v229 = vld [vmem:[%s4 + $0x30] sm:$0xff]
  %v230 = vld [vmem:[%s4 + $0x38] sm:$0xff]
  %v231 = vld [vmem:[%s4 + $0x40] sm:$0xff]
  %v232 = vld [vmem:[%s4 + $0x48] sm:$0xff]
  %v233 = vld [vmem:[%s4 + $0x50] sm:$0xff]
  %v234 = vld [vmem:[%s4 + $0x58] sm:$0xff]
  %v235 = vld [vmem:[%s4 + $0x60] sm:$0xff]
  %v236 = vld [vmem:[%s4 + $0x68] sm:$0xff]
  %v237 = vld [vmem:[%s4 + $0x70] sm:$0xff]
  %v238 = vld [vmem:[%s4 + $0x78] sm:$0xff]
  %240 = vset.pattern.permute.xlu0 0
  %241 = vperm.xlu0 %240, %v223
  %v242 = vpop.permute.xlu0 %241
  %245 = vset.pattern.permute.xlu0 0
  %246 = vperm.xlu0 %245, %v224
  %v247 = vpop.permute.xlu0 %246
  %250 = vset.pattern.permute.xlu0 0
  %251 = vperm.xlu0 %250, %v225
  %v252 = vpop.permute.xlu0 %251
  %255 = vset.pattern.permute.xlu0 0
  %256 = vperm.xlu0 %255, %v226
  %v257 = vpop.permute.xlu0 %256
  %260 = vset.pattern.permute.xlu0 0
  %261 = vperm.xlu0 %260, %v227
  %v262 = vpop.permute.xlu0 %261
  %265 = vset.pattern.permute.xlu0 0
  %266 = vperm.xlu0 %265, %v228
  %v267 = vpop.permute.xlu0 %266
  %270 = vset.pattern.permute.xlu0 0
  %271 = vperm.xlu0 %270, %v229
  %v272 = vpop.permute.xlu0 %271
  %275 = vset.pattern.permute.xlu0 0
  %276 = vperm.xlu0 %275, %v230
  %v277 = vpop.permute.xlu0 %276
  %280 = vset.pattern.permute.xlu0 0
  %281 = vperm.xlu0 %280, %v231
  %v282 = vpop.permute.xlu0 %281
  %285 = vset.pattern.permute.xlu0 0
  %286 = vperm.xlu0 %285, %v232
  %v287 = vpop.permute.xlu0 %286
  %290 = vset.pattern.permute.xlu0 0
  %291 = vperm.xlu0 %290, %v233
  %v292 = vpop.permute.xlu0 %291
  %295 = vset.pattern.permute.xlu0 0
  %296 = vperm.xlu0 %295, %v234
  %v297 = vpop.permute.xlu0 %296
  %300 = vset.pattern.permute.xlu0 0
  %301 = vperm.xlu0 %300, %v235
  %v302 = vpop.permute.xlu0 %301
  %305 = vset.pattern.permute.xlu0 0
  %306 = vperm.xlu0 %305, %v236
  %v307 = vpop.permute.xlu0 %306
  %310 = vset.pattern.permute.xlu0 0
  %311 = vperm.xlu0 %310, %v237
  %v312 = vpop.permute.xlu0 %311
  %315 = vset.pattern.permute.xlu0 0
  %316 = vperm.xlu0 %315, %v238
  %v317 = vpop.permute.xlu0 %316
  %v335 = vunpack.c.l.b16 %v207
  %v336 = vunpack.c.l.b16 %v208
  %v337 = vunpack.c.l.b16 %v209
  %v338 = vunpack.c.l.b16 %v210
  %v339 = vunpack.c.l.b16 %v211
  %v340 = vunpack.c.l.b16 %v212
  %v341 = vunpack.c.l.b16 %v213
  %v342 = vunpack.c.l.b16 %v214
  %v343 = vunpack.c.l.b16 %v215
  %v344 = vunpack.c.l.b16 %v216
  %v345 = vunpack.c.l.b16 %v217
  %v346 = vunpack.c.l.b16 %v218
  %v347 = vunpack.c.l.b16 %v219
  %v348 = vunpack.c.l.b16 %v220
  %v349 = vunpack.c.l.b16 %v221
  %v350 = vunpack.c.l.b16 %v222
  %v351 = vpack.c.b16 %v336, %v335
  %v352 = vpack.c.b16 %v338, %v337
  %v353 = vpack.c.b16 %v340, %v339
  %v354 = vpack.c.b16 %v342, %v341
  %v355 = vpack.c.b16 %v344, %v343
  %v356 = vpack.c.b16 %v346, %v345
  %v357 = vpack.c.b16 %v348, %v347
  %v358 = vpack.c.b16 %v350, %v349
  %vm359 = vcmask 523264
  %v361 = vsel %vm359, %v351, 0
  %v364 = vsel %vm359, %v352, 0
  %v367 = vsel %vm359, %v353, 0
  %v370 = vsel %vm359, %v354, 0
  %v373 = vsel %vm359, %v355, 0
  %v376 = vsel %vm359, %v356, 0
  %v379 = vsel %vm359, %v357, 0
  %v382 = vsel %vm359, %v358, 0
  %384 = vmatprep.subr.bf16.mxu0 0
  %385 = vmatpush1.bf16.msra.mxu0 %v203
  %386 = vmatprep.subr.bf16.mxu0 0
  %387 = vmatpush1.bf16.msra.mxu0 %v204
  %388 = vmatprep.subr.bf16.mxu0 0
  %389 = vmatpush1.bf16.msra.mxu0 %v205
  %390 = vmatprep.subr.bf16.mxu0 0
  %391 = vmatpush1.bf16.msra.mxu0 %v206
  %392 = vmatprep.subr.bf16.mxu0 0
  %393 = vmatpush1.bf16.msra.mxu0 0
  %394 = vmatprep.subr.bf16.mxu0 0
  %395 = vmatpush1.bf16.msra.mxu0 0
  %396 = vmatprep.subr.bf16.mxu0 0
  %397 = vmatpush1.bf16.msra.mxu0 0
  %398 = vmatprep.subr.bf16.mxu0 0
  %399 = vmatpush1.bf16.msra.mxu0 0
  %400 = vmatprep.subr.bf16.mxu0 0
  %401 = vmatpush1.bf16.msra.mxu0 0
  %402 = vmatprep.subr.bf16.mxu0 0
  %403 = vmatpush1.bf16.msra.mxu0 0
  %404 = vmatprep.subr.bf16.mxu0 0
  %405 = vmatpush1.bf16.msra.mxu0 0
  %406 = vmatprep.subr.bf16.mxu0 0
  %407 = vmatpush1.bf16.msra.mxu0 0
  %408 = vmatprep.subr.bf16.mxu0 0
  %409 = vmatpush1.bf16.msra.mxu0 0
  %410 = vmatprep.subr.bf16.mxu0 0
  %411 = vmatpush1.bf16.msra.mxu0 0
  %412 = vmatprep.subr.bf16.mxu0 0
  %413 = vmatpush1.bf16.msra.mxu0 0
  %414 = vmatprep.subr.bf16.mxu0 0
  %415 = vmatpush1.bf16.msra.mxu0 0
  %416 = vmatprep.mubr.bf16.mxu0 0
  %417 = vmatmul.mubr.bf16.gmra.mrb[0].mxu0 %v361
  %v418 = vpop.f32.mrb[0].mxu0
  %v419 = vadd.f32 %v242, %v418
  %v420 = vpop.f32.mrb[0].mxu0
  %v421 = vpop.f32.mrb[0].mxu0
  %v422 = vadd.f32 %v247, %v421
  %v423 = vpop.f32.mrb[0].mxu0
  %424 = vmatprep.mubr.bf16.mxu0 0
  %425 = vmatmul.mubr.bf16.gmra.mrb[0].mxu0 %v364
  %v426 = vpop.f32.mrb[0].mxu0
  %v427 = vadd.f32 %v252, %v426
  %v428 = vpop.f32.mrb[0].mxu0
  %v429 = vpop.f32.mrb[0].mxu0
  %v430 = vadd.f32 %v257, %v429
  %v431 = vpop.f32.mrb[0].mxu0
  %432 = vmatprep.mubr.bf16.mxu0 0
  %433 = vmatmul.mubr.bf16.gmra.mrb[0].mxu0 %v367
  %v434 = vpop.f32.mrb[0].mxu0
  %v435 = vadd.f32 %v262, %v434
  %v436 = vpop.f32.mrb[0].mxu0
  %v437 = vpop.f32.mrb[0].mxu0
  %v438 = vadd.f32 %v267, %v437
  %v439 = vpop.f32.mrb[0].mxu0
  %440 = vmatprep.mubr.bf16.mxu0 0
  %441 = vmatmul.mubr.bf16.gmra.mrb[0].mxu0 %v370
  %v442 = vpop.f32.mrb[0].mxu0
  %v443 = vadd.f32 %v272, %v442
  %v444 = vpop.f32.mrb[0].mxu0
  %v445 = vpop.f32.mrb[0].mxu0
  %v446 = vadd.f32 %v277, %v445
  %v447 = vpop.f32.mrb[0].mxu0
  %448 = vmatprep.mubr.bf16.mxu0 0
  %449 = vmatmul.mubr.bf16.gmra.mrb[0].mxu0 %v373
  %v450 = vpop.f32.mrb[0].mxu0
  %v451 = vadd.f32 %v282, %v450
  %v452 = vpop.f32.mrb[0].mxu0
  %v453 = vpop.f32.mrb[0].mxu0
  %v454 = vadd.f32 %v287, %v453
  %v455 = vpop.f32.mrb[0].mxu0
  %456 = vmatprep.mubr.bf16.mxu0 0
  %457 = vmatmul.mubr.bf16.gmra.mrb[0].mxu0 %v376
  %v458 = vpop.f32.mrb[0].mxu0
  %v459 = vadd.f32 %v292, %v458
  %v460 = vpop.f32.mrb[0].mxu0
  %v461 = vpop.f32.mrb[0].mxu0
  %v462 = vadd.f32 %v297, %v461
  %v463 = vpop.f32.mrb[0].mxu0
  %464 = vmatprep.mubr.bf16.mxu0 0
  %465 = vmatmul.mubr.bf16.gmra.mrb[0].mxu0 %v379
  %v466 = vpop.f32.mrb[0].mxu0
  %v467 = vadd.f32 %v302, %v466
  %v468 = vpop.f32.mrb[0].mxu0
  %v469 = vpop.f32.mrb[0].mxu0
  %v470 = vadd.f32 %v307, %v469
  %v471 = vpop.f32.mrb[0].mxu0
  %472 = vmatprep.mubr.bf16.mxu0 0
  %473 = vmatmul.mubr.bf16.gmra.mrb[0].mxu0 %v382
  %v474 = vpop.f32.mrb[0].mxu0
  %v475 = vadd.f32 %v312, %v474
  %v476 = vpop.f32.mrb[0].mxu0
  %v477 = vpop.f32.mrb[0].mxu0
  %v478 = vadd.f32 %v317, %v477
  %v479 = vpop.f32.mrb[0].mxu0
  %480 = vdwg.mxu0
  %v481 = vmax.f32 %v419, 0.0
  %v482 = vmax.f32 %v422, 0.0
  %v483 = vmax.f32 %v427, 0.0
  %v484 = vmax.f32 %v430, 0.0
  %v485 = vmax.f32 %v435, 0.0
  %v486 = vmax.f32 %v438, 0.0
  %v487 = vmax.f32 %v443, 0.0
  %v488 = vmax.f32 %v446, 0.0
  %v489 = vmax.f32 %v451, 0.0
  %v490 = vmax.f32 %v454, 0.0
  %v491 = vmax.f32 %v459, 0.0
  %v492 = vmax.f32 %v462, 0.0
  %v493 = vmax.f32 %v467, 0.0
  %v494 = vmax.f32 %v470, 0.0
  %v495 = vmax.f32 %v475, 0.0
  %v496 = vmax.f32 %v478, 0.0
  %v497 = vpack.c.bf16 %v482, %v481
  %v498 = vpack.c.bf16 %v484, %v483
  %v499 = vpack.c.bf16 %v486, %v485
  %v500 = vpack.c.bf16 %v488, %v487
  %v501 = vpack.c.bf16 %v490, %v489
  %v502 = vpack.c.bf16 %v492, %v491
  %v503 = vpack.c.bf16 %v494, %v493
  %v504 = vpack.c.bf16 %v496, %v495
  %v505 = vld [vmem:[%s5] sm:$0xf]
  %v506 = vld [vmem:[%s5 + $0x4] sm:$0xf]
  %v507 = vld [vmem:[%s6] sm:$0xff]
  %v508 = vld [vmem:[%s6 + $0x8] sm:$0x7f]
  %510 = vset.pattern.permute.xlu0 0
  %511 = vperm.xlu0 %510, %v507
  %v512 = vpop.permute.xlu0 %511
  %515 = vset.pattern.permute.xlu0 0
  %516 = vperm.xlu0 %515, %v508
  %v517 = vpop.permute.xlu0 %516
  %v521 = vunpack.c.l.b16 %v505
  %v522 = vunpack.c.l.b16 %v506
  %v523 = vpack.c.b16 %v522, %v521
  %525 = vmatprep.subr.bf16.mxu0 0
  %526 = vmatpush1.bf16.msra.mxu0 %v497
  %527 = vmatprep.subr.bf16.mxu0 0
  %528 = vmatpush1.bf16.msra.mxu0 %v498
  %529 = vmatprep.subr.bf16.mxu0 0
  %530 = vmatpush1.bf16.msra.mxu0 %v499
  %531 = vmatprep.subr.bf16.mxu0 0
  %532 = vmatpush1.bf16.msra.mxu0 %v500
  %533 = vmatprep.subr.bf16.mxu0 0
  %534 = vmatpush1.bf16.msra.mxu0 %v501
  %535 = vmatprep.subr.bf16.mxu0 0
  %536 = vmatpush1.bf16.msra.mxu0 %v502
  %537 = vmatprep.subr.bf16.mxu0 0
  %538 = vmatpush1.bf16.msra.mxu0 %v503
  %539 = vmatprep.subr.bf16.mxu0 0
  %540 = vmatpush1.bf16.msra.mxu0 %v504
  %541 = vmatprep.subr.bf16.mxu0 0
  %542 = vmatpush1.bf16.msra.mxu0 0
  %543 = vmatprep.subr.bf16.mxu0 0
  %544 = vmatpush1.bf16.msra.mxu0 0
  %545 = vmatprep.subr.bf16.mxu0 0
  %546 = vmatpush1.bf16.msra.mxu0 0
  %547 = vmatprep.subr.bf16.mxu0 0
  %548 = vmatpush1.bf16.msra.mxu0 0
  %549 = vmatprep.subr.bf16.mxu0 0
  %550 = vmatpush1.bf16.msra.mxu0 0
  %551 = vmatprep.subr.bf16.mxu0 0
  %552 = vmatpush1.bf16.msra.mxu0 0
  %553 = vmatprep.subr.bf16.mxu0 0
  %554 = vmatpush1.bf16.msra.mxu0 0
  %555 = vmatprep.subr.bf16.mxu0 0
  %556 = vmatpush1.bf16.msra.mxu0 0
  %557 = vmatprep.mubr.bf16.mxu0 0
  %558 = vmatmul.mubr.bf16.gmra.mrb[0].mxu0 %v523
  %v559 = vpop.f32.mrb[0].mxu0
  %v560 = vadd.f32 %v512, %v559
  %v561 = vpop.f32.mrb[0].mxu0
  %v562 = vpop.f32.mrb[0].mxu0
  %v563 = vadd.f32 %v517, %v562
  %v564 = vpop.f32.mrb[0].mxu0
  %565 = vdwg.mxu0
  %vm566 = vcmask 64512
  %567 = vst.msk [vmem:[%s7] sm:$0xff] %vm566, %v560
  %vm568 = vcmask 63488
  %569 = vst.msk [vmem:[%s7 + $0x8] sm:$0x7f] %vm568, %v563
  // Predicated region
  $region30: #{tpu_custom_call.1} parent=0 // pred_check
    _
  $region31: #{tpu_custom_call.1} parent=0 // pred_check_branch
    %571 = sbr.rel (0) target = $region33
  $region32: #{tpu_custom_call.1} parent=0 // pred_region
    _
  $region33: #{tpu_custom_call.1} parent=0 // pred_fallthru
    _
  // Predicated region
  $region34: #{tpu_custom_call.1} parent=0 // pred_check
    _
  $region35: #{tpu_custom_call.1} parent=0 // pred_check_branch
    %573 = sbr.rel (0) target = $region37
  $region36: #{tpu_custom_call.1} parent=0 // pred_region
    _
  $region37: #{tpu_custom_call.1} parent=0 // pred_fallthru
    _

</llo_original>
